<compile_context>
chip_gen: v5e
topology: v5e:2x2
jax: 0.10.0
libtpu: 0.0.40
codegen_flags: <defaults>
</compile_context>

<pallas_src>
import functools

import jax
import jax.numpy as jnp
from jax.experimental import pallas as pl
from jax.experimental.pallas import tpu as pltpu


def _decoder_layer_kernel(
    x_ref, kc_ref, vc_ref,
    wqkv_ref, bqkv_ref, wffo_ref, bffo_ref,
    out_ref, kf_ref, vf_ref,
    *, bb, seq, s_past, hidden,
):
    din = x_ref.shape[-1]

    # ---- Fused QKV projection: fold (batch_block, seq) into the MXU M dim.
    x2 = x_ref[...].reshape(bb * seq, din)                            # (M, Din)
    qkv = jnp.dot(x2, wqkv_ref[...],
                  preferred_element_type=jnp.float32) + bqkv_ref[...]  # (M, 3H)
    qkv = qkv.reshape(bb, seq, 3 * hidden)
    q = qkv[:, :, 0 * hidden:1 * hidden]                               # (Bb,S,H)
    k_new = qkv[:, :, 1 * hidden:2 * hidden]
    v_new = qkv[:, :, 2 * hidden:3 * hidden]

    k_cache = kc_ref[...]                                              # (Bb,P,H)
    v_cache = vc_ref[...]

    # ---- Attention.  Scores contract on the last dim of both operands
    # (native MXU, no transpose).  torch Softmax(dim=1) normalizes over the
    # QUERY axis, so each key column is independent: normalize the cache piece
    # and the new piece separately and add their contexts (no concat, no
    # online-softmax state).
    def softmax_over_queries(s):
        m = jnp.max(s, axis=1, keepdims=True)
        e = jnp.exp(s - m)
        d = jnp.sum(e, axis=1, keepdims=True)
        return e * pl.reciprocal(d, approx=True)   # EUP vrcp: ~free slot

    s_new = jnp.einsum("bqh,bkh->bqk", q, k_new,
                       preferred_element_type=jnp.float32)
    ctx = jnp.einsum("bqk,bkh->bqh", softmax_over_queries(s_new), v_new,
                     preferred_element_type=jnp.float32)               # (Bb,S,H)
    if s_past > 0:
        s_c = jnp.einsum("bqh,bkh->bqk", q, k_cache,
                         preferred_element_type=jnp.float32)
        ctx = ctx + jnp.einsum("bqk,bkh->bqh", softmax_over_queries(s_c),
                               v_cache, preferred_element_type=jnp.float32)
    # TODO(synk): for long contexts (esp. v7x 64 MiB VMEM) add a KV/T grid axis
    # ("arbitrary") with (1, tT, H) cache tiles and accumulate ctx in scratch —
    # the per-column normalization above already makes that trivially correct.

    # ---- Fused feed-forward + output projection (one (H,H) matmul; exact
    # because the module has no nonlinearity between ff and output).
    ctx2 = ctx.reshape(bb * seq, hidden)
    o = jnp.dot(ctx2, wffo_ref[...],
                preferred_element_type=jnp.float32) + bffo_ref[...]
    out_ref[...] = o.reshape(bb, seq, hidden).astype(out_ref.dtype)

    # ---- KV cache outputs: copy old rows untouched, append only the new rows.
    # TODO(synk): for a real decode loop, preallocate the cache at max length
    # and write only the new rows in place via input_output_aliases instead of
    # re-emitting the full (B, T, H) cache every call.
    if s_past > 0:
        kf_ref[:, pl.ds(0, s_past), :] = k_cache.astype(kf_ref.dtype)
        vf_ref[:, pl.ds(0, s_past), :] = v_cache.astype(vf_ref.dtype)
    kf_ref[:, pl.ds(s_past, seq), :] = k_new.astype(kf_ref.dtype)
    vf_ref[:, pl.ds(s_past, seq), :] = v_new.astype(vf_ref.dtype)


@functools.partial(jax.jit, static_argnames=("block_b",))
def decoder_layer_forward(x, kv_cache_k, kv_cache_v, params, block_b=8):
    """x: (B, S, Din); kv_cache_{k,v}: (B, S_past, H). Returns (out, (k, v)).

    Requires S_past >= 1 (the torch kv_cache=None path is not handled here).
    """
    B, S, Din = x.shape
    S_past, H = kv_cache_k.shape[1], kv_cache_k.shape[2]
    T = S_past + S
    # TODO(synk): support kv_cache=None (S_past == 0) with a cache-free variant.

    # Fold as many batch elements per grid step as divide B (<= block_b).
    bb = 1
    for d in range(min(B, block_b), 0, -1):
        if B % d == 0:
            bb = d
            break

    # One-time weight prep (outside the grid loop):
    #   * fuse q/k/v weights -> a single (Din, 3H) matmul operand,
    #   * fuse ff -> output (no nonlinearity in the module) into (H, H).
    wqkv = jnp.concatenate([params["wq"], params["wk"], params["wv"]], axis=1)
    bqkv = jnp.concatenate([params["bq"], params["bk"], params["bv"]], axis=1)
    hi = jax.lax.Precision.HIGHEST
    wffo = jnp.dot(params["wff"], params["wout"], precision=hi)        # (H, H)
    bffo = jnp.dot(params["bff"], params["wout"], precision=hi) + params["bout"]

    const2d = lambda b: (0, 0)   # constant-index (resident) weight/bias blocks

    grid_spec = pltpu.PrefetchScalarGridSpec(
        num_scalar_prefetch=0,
        grid=(B // bb,),
        in_specs=[
            pl.BlockSpec((bb, S, Din), lambda b: (b, 0, 0)),
            pl.BlockSpec((bb, S_past, H), lambda b: (b, 0, 0)),
            pl.BlockSpec((bb, S_past, H), lambda b: (b, 0, 0)),
            pl.BlockSpec((Din, 3 * H), const2d),
            pl.BlockSpec((1, 3 * H), const2d),
            pl.BlockSpec((H, H), const2d),
            pl.BlockSpec((1, H), const2d),
        ],
        out_specs=[
            pl.BlockSpec((bb, S, H), lambda b: (b, 0, 0)),
            pl.BlockSpec((bb, T, H), lambda b: (b, 0, 0)),
            pl.BlockSpec((bb, T, H), lambda b: (b, 0, 0)),
        ],
    )

    kernel = functools.partial(
        _decoder_layer_kernel, bb=bb, seq=S, s_past=S_past, hidden=H)

    out, k_full, v_full = pl.pallas_call(
        kernel,
        grid_spec=grid_spec,
        out_shape=[
            jax.ShapeDtypeStruct((B, S, H), x.dtype),
            jax.ShapeDtypeStruct((B, T, H), kv_cache_k.dtype),
            jax.ShapeDtypeStruct((B, T, H), kv_cache_v.dtype),
        ],
        compiler_params=pltpu.CompilerParams(
            dimension_semantics=("parallel",),   # megacore-shardable
            vmem_limit_bytes=32 * 1024 * 1024,
        ),
    )(
        x, kv_cache_k, kv_cache_v,
        wqkv, bqkv,
        wffo, bffo,
    )
    return out, (k_full, v_full)


def _init_params(key, input_size, hidden_size, ffsize):
    """Deterministic parameter init. Weights stored as (in, out) for x @ W."""
    ks = jax.random.split(key, 10)
    scale = 0.05
    return {
        "wq": scale * jax.random.normal(ks[0], (input_size, hidden_size), jnp.float32),
        "bq": scale * jax.random.normal(ks[1], (1, hidden_size), jnp.float32),
        "wk": scale * jax.random.normal(ks[2], (input_size, hidden_size), jnp.float32),
        "bk": scale * jax.random.normal(ks[3], (1, hidden_size), jnp.float32),
        "wv": scale * jax.random.normal(ks[4], (input_size, hidden_size), jnp.float32),
        "bv": scale * jax.random.normal(ks[5], (1, hidden_size), jnp.float32),
        "wff": scale * jax.random.normal(ks[6], (hidden_size, ffsize), jnp.float32),
        "bff": scale * jax.random.normal(ks[7], (1, ffsize), jnp.float32),
        "wout": scale * jax.random.normal(ks[8], (ffsize, hidden_size), jnp.float32),
        "bout": scale * jax.random.normal(ks[9], (1, hidden_size), jnp.float32),
    }


def _reference_forward(x, kc, vc, params):
    """Pure-JAX reference matching the PyTorch module semantics exactly
    (separate q/k/v projections, concat, two separate ff/output Linears)."""
    hi = jax.lax.Precision.HIGHEST
    q = jnp.einsum("bsd,dh->bsh", x, params["wq"], precision=hi) + params["bq"]
    k = jnp.einsum("bsd,dh->bsh", x, params["wk"], precision=hi) + params["bk"]
    v = jnp.einsum("bsd,dh->bsh", x, params["wv"], precision=hi) + params["bv"]
    k = jnp.concatenate([kc, k], axis=1)
    v = jnp.concatenate([vc, v], axis=1)
    scores = jnp.einsum("bqh,bkh->bqk", q, k, precision=hi)
    attn = jax.nn.softmax(scores, axis=1)   # torch Softmax(dim=1): over queries
    ctx = jnp.einsum("bqk,bkh->bqh", attn, v, precision=hi)
    h = jnp.einsum("bqh,hf->bqf", ctx, params["wff"], precision=hi) + params["bff"]
    out = jnp.einsum("bqf,fh->bqh", h, params["wout"], precision=hi) + params["bout"]
    return out, (k, v)


if __name__ == "__main__":
    B, S, S_past = 4, 8, 8
    input_size, hidden_size, ffsize = 32, 32, 64

    key = jax.random.PRNGKey(0)
    k_param, k_x, k_kc, k_vc = jax.random.split(key, 4)

    params = _init_params(k_param, input_size, hidden_size, ffsize)
    x = jax.random.normal(k_x, (B, S, input_size), jnp.float32)
    kv_k = jax.random.normal(k_kc, (B, S_past, hidden_size), jnp.float32)
    kv_v = jax.random.normal(k_vc, (B, S_past, hidden_size), jnp.float32)

    # block_b=2 -> two batch elements folded per grid step, grid of 2 steps.
    out, (k_full, v_full) = decoder_layer_forward(x, kv_k, kv_v, params,
                                                  block_b=2)
    jax.block_until_ready((out, k_full, v_full))

    ref_out, (ref_k, ref_v) = _reference_forward(x, kv_k, kv_v, params)
    # Output tolerance slightly relaxed for the approximate (EUP) reciprocal in
    # the softmax denominator and the exact-algebra ff∘output weight fusion;
    # caches are exact copies / exact matmul outputs.
    assert jnp.allclose(out, ref_out, atol=2e-3, rtol=2e-3), "output mismatch"
    assert jnp.allclose(k_full, ref_k, atol=1e-5, rtol=1e-5), "k cache mismatch"
    assert jnp.allclose(v_full, ref_v, atol=1e-5, rtol=1e-5), "v cache mismatch"

    print("KERNEL_OK")
</pallas_src>

<mosaic_0001>
module attributes {stable_mosaic.version = 11 : i64} {
  func.func @_decoder_layer_kernel(%arg0: i32, %arg1: memref<2x8x32xf32, #tpu.memory_space<vmem>>, %arg2: memref<2x8x32xf32, #tpu.memory_space<vmem>>, %arg3: memref<2x8x32xf32, #tpu.memory_space<vmem>>, %arg4: memref<32x96xf32, #tpu.memory_space<vmem>>, %arg5: memref<1x96xf32, #tpu.memory_space<vmem>>, %arg6: memref<32x32xf32, #tpu.memory_space<vmem>>, %arg7: memref<1x32xf32, #tpu.memory_space<vmem>>, %arg8: memref<2x8x32xf32, #tpu.memory_space<vmem>>, %arg9: memref<2x16x32xf32, #tpu.memory_space<vmem>>, %arg10: memref<2x16x32xf32, #tpu.memory_space<vmem>>) attributes {dimension_semantics = [#tpu.dimension_semantics<parallel>], iteration_bounds = array<i64: 2>, scalar_prefetch = 0 : i64, scratch_operands = 0 : i64, tpu.core_type = #tpu.core_type<tc>, window_params = [{transform_indices = @transform_0, window_bounds = array<i64: 2, 8, 32>}, {transform_indices = @transform_1, window_bounds = array<i64: 2, 8, 32>}, {transform_indices = @transform_2, window_bounds = array<i64: 2, 8, 32>}, {pipeline_mode = #tpu.pipeline_mode<synchronous>, transform_indices = @transform_3, window_bounds = array<i64: 32, 96>}, {pipeline_mode = #tpu.pipeline_mode<synchronous>, transform_indices = @transform_4, window_bounds = array<i64: 1, 96>}, {pipeline_mode = #tpu.pipeline_mode<synchronous>, transform_indices = @transform_5, window_bounds = array<i64: 32, 32>}, {pipeline_mode = #tpu.pipeline_mode<synchronous>, transform_indices = @transform_6, window_bounds = array<i64: 1, 32>}, {transform_indices = @transform_7, window_bounds = array<i64: 2, 8, 32>}, {transform_indices = @transform_8, window_bounds = array<i64: 2, 16, 32>}, {transform_indices = @transform_9, window_bounds = array<i64: 2, 16, 32>}]} {
    %c0 = arith.constant 0 : index
    %c0_0 = arith.constant 0 : index
    %c0_1 = arith.constant 0 : index
    %0 = vector.load %arg1[%c0, %c0_0, %c0_1] : memref<2x8x32xf32, #tpu.memory_space<vmem>>, vector<2x8x32xf32>
    %1 = vector.shape_cast %0 : vector<2x8x32xf32> to vector<16x32xf32>
    %c0_2 = arith.constant 0 : index
    %c0_3 = arith.constant 0 : index
    %2 = vector.load %arg4[%c0_2, %c0_3] : memref<32x96xf32, #tpu.memory_space<vmem>>, vector<32x96xf32>
    %cst = arith.constant dense<0.000000e+00> : vector<16x96xf32>
    %3 = tpu.matmul %1, %2, %cst {dimension_numbers = #tpu.dot_dimension_numbers<[1], [0], [0], [1], [0, 0, 1, 1], [], []>} : vector<16x32xf32>, vector<32x96xf32>, vector<16x96xf32> -> vector<16x96xf32>
    %c0_4 = arith.constant 0 : index
    %c0_5 = arith.constant 0 : index
    %4 = vector.load %arg5[%c0_4, %c0_5] : memref<1x96xf32, #tpu.memory_space<vmem>>, vector<1x96xf32>
    %5 = vector.broadcast %4 : vector<1x96xf32> to vector<16x96xf32>
    %6 = arith.addf %3, %5 : vector<16x96xf32>
    %7 = vector.shape_cast %6 : vector<16x96xf32> to vector<2x8x96xf32>
    %8 = vector.extract_strided_slice %7 {offsets = [0, 0, 0], sizes = [2, 8, 32], strides = [1, 1, 1]} : vector<2x8x96xf32> to vector<2x8x32xf32>
    %9 = vector.extract_strided_slice %7 {offsets = [0, 0, 32], sizes = [2, 8, 32], strides = [1, 1, 1]} : vector<2x8x96xf32> to vector<2x8x32xf32>
    %10 = vector.extract_strided_slice %7 {offsets = [0, 0, 64], sizes = [2, 8, 32], strides = [1, 1, 1]} : vector<2x8x96xf32> to vector<2x8x32xf32>
    %c0_6 = arith.constant 0 : index
    %c0_7 = arith.constant 0 : index
    %c0_8 = arith.constant 0 : index
    %11 = vector.load %arg2[%c0_6, %c0_7, %c0_8] : memref<2x8x32xf32, #tpu.memory_space<vmem>>, vector<2x8x32xf32>
    %c0_9 = arith.constant 0 : index
    %c0_10 = arith.constant 0 : index
    %c0_11 = arith.constant 0 : index
    %12 = vector.load %arg3[%c0_9, %c0_10, %c0_11] : memref<2x8x32xf32, #tpu.memory_space<vmem>>, vector<2x8x32xf32>
    "tpu.trace_start"() <{level = 10 : i32, message = "bqh,bkh->bqk"}> : () -> ()
    %cst_12 = arith.constant dense<0.000000e+00> : vector<2x8x8xf32>
    %13 = tpu.matmul %8, %9, %cst_12 {dimension_numbers = #tpu.dot_dimension_numbers<[2], [2], [1], [1], [0, 0, 0, 1, 1, 1], [0], [0]>} : vector<2x8x32xf32>, vector<2x8x32xf32>, vector<2x8x8xf32> -> vector<2x8x8xf32>
    "tpu.trace_stop"() : () -> ()
    %cst_13 = arith.constant dense<0xFF800000> : vector<2x8xf32>
    %14 = vector.multi_reduction <maximumf>, %13, %cst_13 [1] : vector<2x8x8xf32> to vector<2x8xf32>
    %15 = vector.shape_cast %14 : vector<2x8xf32> to vector<2x1x8xf32>
    %16 = vector.broadcast %15 : vector<2x1x8xf32> to vector<2x8x8xf32>
    %17 = arith.subf %13, %16 : vector<2x8x8xf32>
    %18 = math.exp %17 : vector<2x8x8xf32>
    %cst_14 = arith.constant dense<0.000000e+00> : vector<2x8xf32>
    %19 = vector.multi_reduction <add>, %18, %cst_14 [1] : vector<2x8x8xf32> to vector<2x8xf32>
    %20 = vector.shape_cast %19 : vector<2x8xf32> to vector<2x1x8xf32>
    %21 = tpu.reciprocal %20 {approx = true} : vector<2x1x8xf32> -> vector<2x1x8xf32>
    %22 = vector.broadcast %21 : vector<2x1x8xf32> to vector<2x8x8xf32>
    %23 = arith.mulf %18, %22 : vector<2x8x8xf32>
    "tpu.trace_start"() <{level = 10 : i32, message = "bqk,bkh->bqh"}> : () -> ()
    %cst_15 = arith.constant dense<0.000000e+00> : vector<2x8x32xf32>
    %24 = tpu.matmul %23, %10, %cst_15 {dimension_numbers = #tpu.dot_dimension_numbers<[2], [1], [1], [2], [0, 0, 0, 1, 1, 2], [0], [0]>} : vector<2x8x8xf32>, vector<2x8x32xf32>, vector<2x8x32xf32> -> vector<2x8x32xf32>
    "tpu.trace_stop"() : () -> ()
    "tpu.trace_start"() <{level = 10 : i32, message = "bqh,bkh->bqk"}> : () -> ()
    %cst_16 = arith.constant dense<0.000000e+00> : vector<2x8x8xf32>
    %25 = tpu.matmul %8, %11, %cst_16 {dimension_numbers = #tpu.dot_dimension_numbers<[2], [2], [1], [1], [0, 0, 0, 1, 1, 1], [0], [0]>} : vector<2x8x32xf32>, vector<2x8x32xf32>, vector<2x8x8xf32> -> vector<2x8x8xf32>
    "tpu.trace_stop"() : () -> ()
    %cst_17 = arith.constant dense<0xFF800000> : vector<2x8xf32>
    %26 = vector.multi_reduction <maximumf>, %25, %cst_17 [1] : vector<2x8x8xf32> to vector<2x8xf32>
    %27 = vector.shape_cast %26 : vector<2x8xf32> to vector<2x1x8xf32>
    %28 = vector.broadcast %27 : vector<2x1x8xf32> to vector<2x8x8xf32>
    %29 = arith.subf %25, %28 : vector<2x8x8xf32>
    %30 = math.exp %29 : vector<2x8x8xf32>
    %cst_18 = arith.constant dense<0.000000e+00> : vector<2x8xf32>
    %31 = vector.multi_reduction <add>, %30, %cst_18 [1] : vector<2x8x8xf32> to vector<2x8xf32>
    %32 = vector.shape_cast %31 : vector<2x8xf32> to vector<2x1x8xf32>
    %33 = tpu.reciprocal %32 {approx = true} : vector<2x1x8xf32> -> vector<2x1x8xf32>
    %34 = vector.broadcast %33 : vector<2x1x8xf32> to vector<2x8x8xf32>
    %35 = arith.mulf %30, %34 : vector<2x8x8xf32>
    "tpu.trace_start"() <{level = 10 : i32, message = "bqk,bkh->bqh"}> : () -> ()
    %cst_19 = arith.constant dense<0.000000e+00> : vector<2x8x32xf32>
    %36 = tpu.matmul %35, %12, %cst_19 {dimension_numbers = #tpu.dot_dimension_numbers<[2], [1], [1], [2], [0, 0, 0, 1, 1, 2], [0], [0]>} : vector<2x8x8xf32>, vector<2x8x32xf32>, vector<2x8x32xf32> -> vector<2x8x32xf32>
    "tpu.trace_stop"() : () -> ()
    %37 = arith.addf %24, %36 : vector<2x8x32xf32>
    %38 = vector.shape_cast %37 : vector<2x8x32xf32> to vector<16x32xf32>
    %c0_20 = arith.constant 0 : index
    %c0_21 = arith.constant 0 : index
    %39 = vector.load %arg6[%c0_20, %c0_21] : memref<32x32xf32, #tpu.memory_space<vmem>>, vector<32x32xf32>
    %cst_22 = arith.constant dense<0.000000e+00> : vector<16x32xf32>
    %40 = tpu.matmul %38, %39, %cst_22 {dimension_numbers = #tpu.dot_dimension_numbers<[1], [0], [0], [1], [0, 0, 1, 1], [], []>} : vector<16x32xf32>, vector<32x32xf32>, vector<16x32xf32> -> vector<16x32xf32>
    %c0_23 = arith.constant 0 : index
    %c0_24 = arith.constant 0 : index
    %41 = vector.load %arg7[%c0_23, %c0_24] : memref<1x32xf32, #tpu.memory_space<vmem>>, vector<1x32xf32>
    %42 = vector.broadcast %41 : vector<1x32xf32> to vector<16x32xf32>
    %43 = arith.addf %40, %42 : vector<16x32xf32>
    %44 = vector.shape_cast %43 : vector<16x32xf32> to vector<2x8x32xf32>
    %c0_25 = arith.constant 0 : index
    %c0_26 = arith.constant 0 : index
    %c0_27 = arith.constant 0 : index
    %45 = vector.load %arg8[%c0_25, %c0_26, %c0_27] : memref<2x8x32xf32, #tpu.memory_space<vmem>>, vector<2x8x32xf32>
    tpu.vector_store %arg8[%c0_25, %c0_26, %c0_27], %44 {strides = array<i32>} : memref<2x8x32xf32, #tpu.memory_space<vmem>>, vector<2x8x32xf32>,
    %c0_28 = arith.constant 0 : index
    %c0_29 = arith.constant 0 : index
    %c0_30 = arith.constant 0 : index
    %46 = vector.load %arg9[%c0_28, %c0_29, %c0_30] : memref<2x16x32xf32, #tpu.memory_space<vmem>>, vector<2x8x32xf32>
    tpu.vector_store %arg9[%c0_28, %c0_29, %c0_30], %11 {strides = array<i32>} : memref<2x16x32xf32, #tpu.memory_space<vmem>>, vector<2x8x32xf32>,
    %c0_31 = arith.constant 0 : index
    %c0_32 = arith.constant 0 : index
    %c0_33 = arith.constant 0 : index
    %47 = vector.load %arg10[%c0_31, %c0_32, %c0_33] : memref<2x16x32xf32, #tpu.memory_space<vmem>>, vector<2x8x32xf32>
    tpu.vector_store %arg10[%c0_31, %c0_32, %c0_33], %12 {strides = array<i32>} : memref<2x16x32xf32, #tpu.memory_space<vmem>>, vector<2x8x32xf32>,
    %c0_34 = arith.constant 0 : index
    %c8 = arith.constant 8 : index
    %c0_35 = arith.constant 0 : index
    %48 = vector.load %arg9[%c0_34, %c8, %c0_35] : memref<2x16x32xf32, #tpu.memory_space<vmem>>, vector<2x8x32xf32>
    tpu.vector_store %arg9[%c0_34, %c8, %c0_35], %9 {strides = array<i32>} : memref<2x16x32xf32, #tpu.memory_space<vmem>>, vector<2x8x32xf32>,
    %c0_36 = arith.constant 0 : index
    %c8_37 = arith.constant 8 : index
    %c0_38 = arith.constant 0 : index
    %49 = vector.load %arg10[%c0_36, %c8_37, %c0_38] : memref<2x16x32xf32, #tpu.memory_space<vmem>>, vector<2x8x32xf32>
    tpu.vector_store %arg10[%c0_36, %c8_37, %c0_38], %10 {strides = array<i32>} : memref<2x16x32xf32, #tpu.memory_space<vmem>>, vector<2x8x32xf32>,
    return
  }
  func.func @transform_0(%arg0: i32) -> (i32, i32, i32) {
    %c0_i32 = arith.constant 0 : i32
    %c0_i32_0 = arith.constant 0 : i32
    %c0_i32_1 = arith.constant 0 : i32
    return %arg0, %c0_i32, %c0_i32_0 : i32, i32, i32
  }
  func.func @transform_1(%arg0: i32) -> (i32, i32, i32) {
    %c0_i32 = arith.constant 0 : i32
    %c0_i32_0 = arith.constant 0 : i32
    %c0_i32_1 = arith.constant 0 : i32
    return %arg0, %c0_i32, %c0_i32_0 : i32, i32, i32
  }
  func.func @transform_2(%arg0: i32) -> (i32, i32, i32) {
    %c0_i32 = arith.constant 0 : i32
    %c0_i32_0 = arith.constant 0 : i32
    %c0_i32_1 = arith.constant 0 : i32
    return %arg0, %c0_i32, %c0_i32_0 : i32, i32, i32
  }
  func.func @transform_3(%arg0: i32) -> (i32, i32) {
    %c0_i32 = arith.constant 0 : i32
    %c0_i32_0 = arith.constant 0 : i32
    %c0_i32_1 = arith.constant 0 : i32
    return %c0_i32, %c0_i32_0 : i32, i32
  }
  func.func @transform_4(%arg0: i32) -> (i32, i32) {
    %c0_i32 = arith.constant 0 : i32
    %c0_i32_0 = arith.constant 0 : i32
    %c0_i32_1 = arith.constant 0 : i32
    return %c0_i32, %c0_i32_0 : i32, i32
  }
  func.func @transform_5(%arg0: i32) -> (i32, i32) {
    %c0_i32 = arith.constant 0 : i32
    %c0_i32_0 = arith.constant 0 : i32
    %c0_i32_1 = arith.constant 0 : i32
    return %c0_i32, %c0_i32_0 : i32, i32
  }
  func.func @transform_6(%arg0: i32) -> (i32, i32) {
    %c0_i32 = arith.constant 0 : i32
    %c0_i32_0 = arith.constant 0 : i32
    %c0_i32_1 = arith.constant 0 : i32
    return %c0_i32, %c0_i32_0 : i32, i32
  }
  func.func @transform_7(%arg0: i32) -> (i32, i32, i32) {
    %c0_i32 = arith.constant 0 : i32
    %c0_i32_0 = arith.constant 0 : i32
    %c0_i32_1 = arith.constant 0 : i32
    return %arg0, %c0_i32, %c0_i32_0 : i32, i32, i32
  }
  func.func @transform_8(%arg0: i32) -> (i32, i32, i32) {
    %c0_i32 = arith.constant 0 : i32
    %c0_i32_0 = arith.constant 0 : i32
    %c0_i32_1 = arith.constant 0 : i32
    return %arg0, %c0_i32, %c0_i32_0 : i32, i32, i32
  }
  func.func @transform_9(%arg0: i32) -> (i32, i32, i32) {
    %c0_i32 = arith.constant 0 : i32
    %c0_i32_0 = arith.constant 0 : i32
    %c0_i32_1 = arith.constant 0 : i32
    return %arg0, %c0_i32, %c0_i32_0 : i32, i32, i32
  }
}

</mosaic_0001>

<llo_original>
// kernel: decoder_layer_forward.1
$region0: #{decoder_layer_forward.1}
  #allocation0 [shape = 'u32[]', space=smem, size = 0x4, offset = 0x4, fixed_abs, tag = 'smem constant byte address 0x4 - core index']
  #allocation1 [shape = 'u32[72,128]{1,0:T(1,128)}', space=vmem, size = 0x9000, scoped, tag = 'internal scratch']
  %s0 = inlined_call_operand.vmem [shape: f32[4,8,32], index: 0, kind: input, shape index: {}]
  %s1 = inlined_call_operand.vmem [shape: f32[4,8,32], index: 1, kind: input, shape index: {}]
  %s2 = inlined_call_operand.vmem [shape: f32[4,8,32], index: 2, kind: input, shape index: {}]
  %s3 = inlined_call_operand.vmem [shape: f32[32,96], index: 3, kind: input, shape index: {}]
  %s4 = inlined_call_operand.vmem [shape: f32[1,96], index: 4, kind: input, shape index: {}]
  %s5 = inlined_call_operand.vmem [shape: f32[32,32], index: 5, kind: input, shape index: {}]
  %s6 = inlined_call_operand.vmem [shape: f32[1,32], index: 6, kind: input, shape index: {}]
  %s7 = inlined_call_operand.hbm [shape: f32[4,8,32], index: 7, kind: output, shape index: {0}]
  %s8 = inlined_call_operand.hbm [shape: f32[4,16,32], index: 8, kind: output, shape index: {1}]
  %s9 = inlined_call_operand.hbm [shape: f32[4,16,32], index: 9, kind: output, shape index: {2}]
  %10 = xla_tuple %s7, %s8, %s9
  %s11 = sld [smem:[#allocation0]]
  $region77: #{decoder_layer_forward.1} parent=0
    _
  %s13 = ssub.s32 1, %s11
  %s14 = scalar_select 0, %s13, %s11
  $region1: #{decoder_layer_forward.1} parent=0
    #allocation2 [shape = 'u8[16384]{0}', space=vmem, size = 0x4000, scoped, tag = 'output window, operand 0']
    #allocation3 [shape = 's32[2]{0}', space=sflag, size = 0x8, scoped, tag = 'scoped memory for decoder_layer_forward.1']
    #allocation4 [shape = 'u8[32768]{0}', space=vmem, size = 0x8000, scoped, tag = 'output window, operand 1']
    #allocation5 [shape = 's32[2]{0}', space=sflag, size = 0x8, scoped, tag = 'scoped memory for decoder_layer_forward.1']
    #allocation6 [shape = 'u8[32768]{0}', space=vmem, size = 0x8000, scoped, tag = 'output window, operand 2']
    %15 = vsyncpa [#allocation3], 0
    %s16 = scalar_lea.sflag [#allocation3], 1
    %17 = vsyncpa %s16, 0
    %18 = vsyncpa [#allocation5], 0
    %s19 = scalar_lea.sflag [#allocation5], 1
    %20 = vsyncpa %s19, 0
    loop: start=0, step=1, limit=4
    $region2: #{decoder_layer_forward.1} parent=1 // loop_pre_header
      _
    $region3: #{decoder_layer_forward.1} parent=1 // loop_header
      %s22 = sphi 0, %s26
      %p23 = scmp.ge.s32.totalorder %s22, 4
      %s32 = sphi 0, %s34
      %s35 = sphi 0, %s32
      %s36 = sphi 0, %s35
      %s52 = sphi 0, %s36
      %s58 = sphi 0, %s60
      %s61 = sphi 0, %s58
      %s62 = sphi 0, %s61
      %s78 = sphi 0, %s62
      %s84 = sphi 0, %s86
      %s87 = sphi 0, %s84
      %s88 = sphi 0, %s87
      %s104 = sphi 0, %s88
      %s108 = sphi 0, %s108
      %s110 = sphi 0, %s108
      %s111 = sphi 0, %s110
      %s125 = sphi 0, %s111
      %s129 = sphi 0, %s129
      %s131 = sphi 0, %s129
      %s132 = sphi 0, %s131
      %s146 = sphi 0, %s132
      %s150 = sphi 0, %s150
      %s152 = sphi 0, %s150
      %s153 = sphi 0, %s152
      %s167 = sphi 0, %s153
      %s171 = sphi 0, %s171
      %s173 = sphi 0, %s171
      %s174 = sphi 0, %s173
      %s188 = sphi 0, %s174
      %s194 = sphi 0, %s196
      %s197 = sphi 0, %s194
      %s198 = sphi 0, %s197
      %s214 = sphi 0, %s198
      %s220 = sphi 0, %s222
      %s223 = sphi 0, %s220
      %s224 = sphi 0, %s223
      %s240 = sphi 0, %s224
      %s246 = sphi 0, %s248
      %s249 = sphi 0, %s246
      %s250 = sphi 0, %s249
      %s266 = sphi 0, %s250
    $region4: #{decoder_layer_forward.1} parent=1 // loop_header_branch
      %25 = sbr.rel (%p23) target = $region8
    $region5: #{decoder_layer_forward.1} parent=1 // loop_body
      %s27 = ssub.s32 %s22, 1
      %s28 = ssub.s32 %s22, 2
      %s29 = sadd.s32 %s22, 1
      %s30 = ssub.s32 %s22, %s29
      %p31 = scmp.eq.s32.totalorder %s30, 0
      %s33 = sadd.s32 %s32, 1
      %s34 = scalar_select %p31, %s32, %s33
      %p37 = pneg %p31
      %p38 = scmp.eq.s32.totalorder %s22, 1
      %p39 = por %p37, %p38
      %p40 = scmp.ne.s32.totalorder %s32, %s35
      %p41 = scmp.eq.s32.totalorder %s22, 0
      %p42 = por %p40, %p41
      %p43 = scmp.ne.s32.totalorder %s32, %s35
      %p44 = scmp.eq.s32.totalorder %s27, 1
      %p45 = por %p43, %p44
      %p46 = scmp.ne.s32.totalorder %s35, %s36
      %p47 = scmp.eq.s32.totalorder %s27, 0
      %p48 = por %p46, %p47
      %p49 = scmp.ne.s32.totalorder %s35, %s36
      %p50 = scmp.eq.s32.totalorder %s28, 1
      %p51 = por %p49, %p50
      %p53 = scmp.ne.s32.totalorder %s36, %s52
      %p54 = scmp.eq.s32.totalorder %s28, 0
      %p55 = por %p53, %p54
      %s56 = ssub.s32 %s22, %s29
      %p57 = scmp.eq.s32.totalorder %s56, 0
      %s59 = sadd.s32 %s58, 1
      %s60 = scalar_select %p57, %s58, %s59
      %p63 = pneg %p57
      %p64 = scmp.eq.s32.totalorder %s22, 1
      %p65 = por %p63, %p64
      %p66 = scmp.ne.s32.totalorder %s58, %s61
      %p67 = scmp.eq.s32.totalorder %s22, 0
      %p68 = por %p66, %p67
      %p69 = scmp.ne.s32.totalorder %s58, %s61
      %p70 = scmp.eq.s32.totalorder %s27, 1
      %p71 = por %p69, %p70
      %p72 = scmp.ne.s32.totalorder %s61, %s62
      %p73 = scmp.eq.s32.totalorder %s27, 0
      %p74 = por %p72, %p73
      %p75 = scmp.ne.s32.totalorder %s61, %s62
      %p76 = scmp.eq.s32.totalorder %s28, 1
      %p77 = por %p75, %p76
      %p79 = scmp.ne.s32.totalorder %s62, %s78
      %p80 = scmp.eq.s32.totalorder %s28, 0
      %p81 = por %p79, %p80
      %s82 = ssub.s32 %s22, %s29
      %p83 = scmp.eq.s32.totalorder %s82, 0
      %s85 = sadd.s32 %s84, 1
      %s86 = scalar_select %p83, %s84, %s85
      %p89 = pneg %p83
      %p90 = scmp.eq.s32.totalorder %s22, 1
      %p91 = por %p89, %p90
      %p92 = scmp.ne.s32.totalorder %s84, %s87
      %p93 = scmp.eq.s32.totalorder %s22, 0
      %p94 = por %p92, %p93
      %p95 = scmp.ne.s32.totalorder %s84, %s87
      %p96 = scmp.eq.s32.totalorder %s27, 1
      %p97 = por %p95, %p96
      %p98 = scmp.ne.s32.totalorder %s87, %s88
      %p99 = scmp.eq.s32.totalorder %s27, 0
      %p100 = por %p98, %p99
      %p101 = scmp.ne.s32.totalorder %s87, %s88
      %p102 = scmp.eq.s32.totalorder %s28, 1
      %p103 = por %p101, %p102
      %p105 = scmp.ne.s32.totalorder %s88, %s104
      %p106 = scmp.eq.s32.totalorder %s28, 0
      %p107 = por %p105, %p106
      %s109 = sadd.s32 %s108, 1
      %p112 = scmp.eq.s32.totalorder %s22, 1
      %p113 = scmp.ne.s32.totalorder %s108, %s110
      %p114 = scmp.eq.s32.totalorder %s22, 0
      %p115 = por %p113, %p114
      %p116 = scmp.ne.s32.totalorder %s108, %s110
      %p117 = scmp.eq.s32.totalorder %s27, 1
      %p118 = por %p116, %p117
      %p119 = scmp.ne.s32.totalorder %s110, %s111
      %p120 = scmp.eq.s32.totalorder %s27, 0
      %p121 = por %p119, %p120
      %p122 = scmp.ne.s32.totalorder %s110, %s111
      %p123 = scmp.eq.s32.totalorder %s28, 1
      %p124 = por %p122, %p123
      %p126 = scmp.ne.s32.totalorder %s111, %s125
      %p127 = scmp.eq.s32.totalorder %s28, 0
      %p128 = por %p126, %p127
      %s130 = sadd.s32 %s129, 1
      %p133 = scmp.eq.s32.totalorder %s22, 1
      %p134 = scmp.ne.s32.totalorder %s129, %s131
      %p135 = scmp.eq.s32.totalorder %s22, 0
      %p136 = por %p134, %p135
      %p137 = scmp.ne.s32.totalorder %s129, %s131
      %p138 = scmp.eq.s32.totalorder %s27, 1
      %p139 = por %p137, %p138
      %p140 = scmp.ne.s32.totalorder %s131, %s132
      %p141 = scmp.eq.s32.totalorder %s27, 0
      %p142 = por %p140, %p141
      %p143 = scmp.ne.s32.totalorder %s131, %s132
      %p144 = scmp.eq.s32.totalorder %s28, 1
      %p145 = por %p143, %p144
      %p147 = scmp.ne.s32.totalorder %s132, %s146
      %p148 = scmp.eq.s32.totalorder %s28, 0
      %p149 = por %p147, %p148
      %s151 = sadd.s32 %s150, 1
      %p154 = scmp.eq.s32.totalorder %s22, 1
      %p155 = scmp.ne.s32.totalorder %s150, %s152
      %p156 = scmp.eq.s32.totalorder %s22, 0
      %p157 = por %p155, %p156
      %p158 = scmp.ne.s32.totalorder %s150, %s152
      %p159 = scmp.eq.s32.totalorder %s27, 1
      %p160 = por %p158, %p159
      %p161 = scmp.ne.s32.totalorder %s152, %s153
      %p162 = scmp.eq.s32.totalorder %s27, 0
      %p163 = por %p161, %p162
      %p164 = scmp.ne.s32.totalorder %s152, %s153
      %p165 = scmp.eq.s32.totalorder %s28, 1
      %p166 = por %p164, %p165
      %p168 = scmp.ne.s32.totalorder %s153, %s167
      %p169 = scmp.eq.s32.totalorder %s28, 0
      %p170 = por %p168, %p169
      %s172 = sadd.s32 %s171, 1
      %p175 = scmp.eq.s32.totalorder %s22, 1
      %p176 = scmp.ne.s32.totalorder %s171, %s173
      %p177 = scmp.eq.s32.totalorder %s22, 0
      %p178 = por %p176, %p177
      %p179 = scmp.ne.s32.totalorder %s171, %s173
      %p180 = scmp.eq.s32.totalorder %s27, 1
      %p181 = por %p179, %p180
      %p182 = scmp.ne.s32.totalorder %s173, %s174
      %p183 = scmp.eq.s32.totalorder %s27, 0
      %p184 = por %p182, %p183
      %p185 = scmp.ne.s32.totalorder %s173, %s174
      %p186 = scmp.eq.s32.totalorder %s28, 1
      %p187 = por %p185, %p186
      %p189 = scmp.ne.s32.totalorder %s174, %s188
      %p190 = scmp.eq.s32.totalorder %s28, 0
      %p191 = por %p189, %p190
      %s192 = ssub.s32 %s22, %s29
      %p193 = scmp.eq.s32.totalorder %s192, 0
      %s195 = sadd.s32 %s194, 1
      %s196 = scalar_select %p193, %s194, %s195
      %p199 = pneg %p193
      %p200 = scmp.eq.s32.totalorder %s22, 1
      %p201 = por %p199, %p200
      %p202 = scmp.ne.s32.totalorder %s194, %s197
      %p203 = scmp.eq.s32.totalorder %s22, 0
      %p204 = por %p202, %p203
      %p205 = scmp.ne.s32.totalorder %s194, %s197
      %p206 = scmp.eq.s32.totalorder %s27, 1
      %p207 = por %p205, %p206
      %p208 = scmp.ne.s32.totalorder %s197, %s198
      %p209 = scmp.eq.s32.totalorder %s27, 0
      %p210 = por %p208, %p209
      %p211 = scmp.ne.s32.totalorder %s197, %s198
      %p212 = scmp.eq.s32.totalorder %s28, 1
      %p213 = por %p211, %p212
      %p215 = scmp.ne.s32.totalorder %s198, %s214
      %p216 = scmp.eq.s32.totalorder %s28, 0
      %p217 = por %p215, %p216
      %s218 = ssub.s32 %s22, %s29
      %p219 = scmp.eq.s32.totalorder %s218, 0
      %s221 = sadd.s32 %s220, 1
      %s222 = scalar_select %p219, %s220, %s221
      %p225 = pneg %p219
      %p226 = scmp.eq.s32.totalorder %s22, 1
      %p227 = por %p225, %p226
      %p228 = scmp.ne.s32.totalorder %s220, %s223
      %p229 = scmp.eq.s32.totalorder %s22, 0
      %p230 = por %p228, %p229
      %p231 = scmp.ne.s32.totalorder %s220, %s223
      %p232 = scmp.eq.s32.totalorder %s27, 1
      %p233 = por %p231, %p232
      %p234 = scmp.ne.s32.totalorder %s223, %s224
      %p235 = scmp.eq.s32.totalorder %s27, 0
      %p236 = por %p234, %p235
      %p237 = scmp.ne.s32.totalorder %s223, %s224
      %p238 = scmp.eq.s32.totalorder %s28, 1
      %p239 = por %p237, %p238
      %p241 = scmp.ne.s32.totalorder %s224, %s240
      %p242 = scmp.eq.s32.totalorder %s28, 0
      %p243 = por %p241, %p242
      %s244 = ssub.s32 %s22, %s29
      %p245 = scmp.eq.s32.totalorder %s244, 0
      %s247 = sadd.s32 %s246, 1
      %s248 = scalar_select %p245, %s246, %s247
      %p251 = pneg %p245
      %p252 = scmp.eq.s32.totalorder %s22, 1
      %p253 = por %p251, %p252
      %p254 = scmp.ne.s32.totalorder %s246, %s249
      %p255 = scmp.eq.s32.totalorder %s22, 0
      %p256 = por %p254, %p255
      %p257 = scmp.ne.s32.totalorder %s246, %s249
      %p258 = scmp.eq.s32.totalorder %s27, 1
      %p259 = por %p257, %p258
      %p260 = scmp.ne.s32.totalorder %s249, %s250
      %p261 = scmp.eq.s32.totalorder %s27, 0
      %p262 = por %p260, %p261
      %p263 = scmp.ne.s32.totalorder %s249, %s250
      %p264 = scmp.eq.s32.totalorder %s28, 1
      %p265 = por %p263, %p264
      %p267 = scmp.ne.s32.totalorder %s250, %s266
      %p268 = scmp.eq.s32.totalorder %s28, 0
      %p269 = por %p267, %p268
      %p270 = scmp.le.s32.totalorder 1, %s22
      %p271 = scmp.lt.s32.totalorder %s22, 3
      %p272 = pnand %p270, %p271
      %p273 = pneg %p272
      // Predicated region
      $region9: #{decoder_layer_forward.1} parent=5 // pred_check
        _
      $region10: #{decoder_layer_forward.1} parent=5 // pred_check_branch
        %275 = sbr.rel (%p272) target = $region12
      $region11: #{decoder_layer_forward.1} parent=5 // pred_region
        %s276 = ssub.s32 %s22, 1
        // Predicated region
        $region13: #{decoder_layer_forward.1} parent=11 // pred_check
          %p277 = pneg %p121
        $region14: #{decoder_layer_forward.1} parent=11 // pred_check_branch
          %279 = sbr.rel (%p277) target = $region16
        $region15: #{decoder_layer_forward.1} parent=11 // pred_region
          _
        $region16: #{decoder_layer_forward.1} parent=11 // pred_fallthru
          _
        // Predicated region
        $region17: #{decoder_layer_forward.1} parent=11 // pred_check
          %p280 = pneg %p142
        $region18: #{decoder_layer_forward.1} parent=11 // pred_check_branch
          %282 = sbr.rel (%p280) target = $region20
        $region19: #{decoder_layer_forward.1} parent=11 // pred_region
          _
        $region20: #{decoder_layer_forward.1} parent=11 // pred_fallthru
          _
        // Predicated region
        $region21: #{decoder_layer_forward.1} parent=11 // pred_check
          %p283 = pneg %p163
        $region22: #{decoder_layer_forward.1} parent=11 // pred_check_branch
          %285 = sbr.rel (%p283) target = $region24
        $region23: #{decoder_layer_forward.1} parent=11 // pred_region
          _
        $region24: #{decoder_layer_forward.1} parent=11 // pred_fallthru
          _
        // Predicated region
        $region25: #{decoder_layer_forward.1} parent=11 // pred_check
          %p286 = pneg %p184
        $region26: #{decoder_layer_forward.1} parent=11 // pred_check_branch
          %288 = sbr.rel (%p286) target = $region28
        $region27: #{decoder_layer_forward.1} parent=11 // pred_region
          _
        $region28: #{decoder_layer_forward.1} parent=11 // pred_fallthru
          _
      $region12: #{decoder_layer_forward.1} parent=5 // pred_fallthru
        _
      %p289 = scmp.lt.s32.totalorder %s22, 2
      // Predicated region
      $region29: #{decoder_layer_forward.1} parent=5 // pred_check
        %p290 = pneg %p289
      $region30: #{decoder_layer_forward.1} parent=5 // pred_check_branch
        %292 = sbr.rel (%p290) target = $region32
      $region31: #{decoder_layer_forward.1} parent=5 // pred_region
        // Predicated region
        $region33: #{decoder_layer_forward.1} parent=31 // pred_check
          %p293 = pneg %p42
        $region34: #{decoder_layer_forward.1} parent=31 // pred_check_branch
          %295 = sbr.rel (%p293) target = $region36
        $region35: #{decoder_layer_forward.1} parent=31 // pred_region
          %s296 = smul.u32 2, %s22
          %p297 = scmp.lt.s32.totalorder %s296, 3
          %s298 = scalar_select %p297, %s296, 3
          %s299 = smul.addr %s298, 8
          %s300 = scalar_lea.vmem %s0, %s299
          %s301 = smul.u32 2, %s22
        $region36: #{decoder_layer_forward.1} parent=31 // pred_fallthru
          _
        // Predicated region
        $region37: #{decoder_layer_forward.1} parent=31 // pred_check
          %p302 = pneg %p68
        $region38: #{decoder_layer_forward.1} parent=31 // pred_check_branch
          %304 = sbr.rel (%p302) target = $region40
        $region39: #{decoder_layer_forward.1} parent=31 // pred_region
          %s305 = smul.u32 2, %s22
          %p306 = scmp.lt.s32.totalorder %s305, 3
          %s307 = scalar_select %p306, %s305, 3
          %s308 = smul.addr %s307, 8
          %s309 = scalar_lea.vmem %s1, %s308
          %s310 = smul.u32 2, %s22
        $region40: #{decoder_layer_forward.1} parent=31 // pred_fallthru
          _
        // Predicated region
        $region41: #{decoder_layer_forward.1} parent=31 // pred_check
          %p311 = pneg %p94
        $region42: #{decoder_layer_forward.1} parent=31 // pred_check_branch
          %313 = sbr.rel (%p311) target = $region44
        $region43: #{decoder_layer_forward.1} parent=31 // pred_region
          %s314 = smul.u32 2, %s22
          %p315 = scmp.lt.s32.totalorder %s314, 3
          %s316 = scalar_select %p315, %s314, 3
          %s317 = smul.addr %s316, 8
          %s318 = scalar_lea.vmem %s2, %s317
          %s319 = smul.u32 2, %s22
        $region44: #{decoder_layer_forward.1} parent=31 // pred_fallthru
          _
      $region32: #{decoder_layer_forward.1} parent=5 // pred_fallthru
        _
      %p320 = scmp.le.s32.totalorder 1, %s22
      %p321 = scmp.lt.s32.totalorder %s22, 3
      %p322 = pnand %p320, %p321
      %p323 = pneg %p322
      // Predicated region
      $region45: #{decoder_layer_forward.1} parent=5 // pred_check
        _
      $region46: #{decoder_layer_forward.1} parent=5 // pred_check_branch
        %325 = sbr.rel (%p322) target = $region48
      $region47: #{decoder_layer_forward.1} parent=5 // pred_region
        %s326 = ssub.s32 %s22, 1
        %s327 = smul.u32 2, %s27
        %p328 = scmp.lt.s32.totalorder %s327, 3
        %s329 = scalar_select %p328, %s327, 3
        %s330 = smul.addr %s329, 8
        %s331 = scalar_lea.vmem %s0, %s330
        %p332 = pneg %p48
        %p333 = pneg %p45
        %s334 = smul.u32 2, %s27
        %p335 = scmp.lt.s32.totalorder %s334, 3
        %s336 = scalar_select %p335, %s334, 3
        %s337 = smul.addr %s336, 8
        %s338 = scalar_lea.vmem %s1, %s337
        %p339 = pneg %p74
        %p340 = pneg %p71
        %s341 = smul.u32 2, %s27
        %p342 = scmp.lt.s32.totalorder %s341, 3
        %s343 = scalar_select %p342, %s341, 3
        %s344 = smul.addr %s343, 8
        %s345 = scalar_lea.vmem %s2, %s344
        %p346 = pneg %p100
        %p347 = pneg %p97
        %p348 = pneg %p121
        %p349 = pneg %p118
        %p350 = pneg %p142
        %p351 = pneg %p139
        %p352 = pneg %p163
        %p353 = pneg %p160
        %p354 = pneg %p184
        %p355 = pneg %p181
        %p356 = pneg %p210
        %p357 = pneg %p207
        %s358 = sand.u32 %s197, 1
        %s359 = scalar_lea.sflag [#allocation3], %s358
        %s360 = sand.u32 %s197, 1
        %s361 = smul.addr %s360, 16
        %s362 = scalar_lea.vmem [#allocation2], %s361
        %p363 = pneg %p236
        %p364 = pneg %p233
        %s365 = sand.u32 %s27, 1
        %s366 = scalar_lea.sflag [#allocation5], %s365
        %s367 = sand.u32 %s223, 1
        %s368 = smul.addr %s367, 32
        %s369 = scalar_lea.vmem [#allocation4], %s368
        %p370 = pneg %p262
        %p371 = pneg %p259
        %s372 = sand.u32 %s27, 1
        %s373 = scalar_lea.sflag [#allocation5], %s372
        %s374 = sand.u32 %s249, 1
        %s375 = smul.addr %s374, 32
        %s376 = scalar_lea.vmem [#allocation6], %s375
        %s377 = smul.u32 2, %s27
        %p378 = scmp.lt.s32.totalorder %s377, 3
        %s379 = scalar_select %p378, %s377, 3
        %s380 = smul.addr %s379, 8
        %s381 = scalar_lea.vmem %s0, %s380
        %s382 = smul.u32 2, %s27
        %s383 = smul.u32 2, %s27
        %p384 = scmp.lt.s32.totalorder %s383, 3
        %s385 = scalar_select %p384, %s383, 3
        %s386 = smul.addr %s385, 8
        %s387 = scalar_lea.vmem %s1, %s386
        %s388 = smul.u32 2, %s27
        %s389 = smul.u32 2, %s27
        %p390 = scmp.lt.s32.totalorder %s389, 3
        %s391 = scalar_select %p390, %s389, 3
        %s392 = smul.addr %s391, 8
        %s393 = scalar_lea.vmem %s2, %s392
        %s394 = smul.u32 2, %s27
        %s395 = smul.u32 2, %s27
        %s396 = smul.u32 2, %s27
        %s397 = smul.u32 2, %s27
        %v398 = vld [vmem:[%s381] sm:$0xff]
        %v399 = vld [vmem:[%s381 + $0x8] sm:$0xff]
        %v400 = vld [vmem:[%s3] sm:$0xff]
        %v401 = vld [vmem:[%s3 + $0x8] sm:$0xff]
        %v402 = vld [vmem:[%s3 + $0x10] sm:$0xff]
        %v403 = vld [vmem:[%s3 + $0x18] sm:$0xff]
        %v404 = vld [vmem:[%s4] sm:$0x1]
        %v406 = vperm.slane %v404, 0
        %vm408 = vcmask 261120
        %v410 = vsel %vm408, %v398, 0
        %v413 = vsel %vm408, %v399, 0
        %415 = vmatpush.msra.mxu0 0.0
        %416 = vmatpush.msra.mxu0 0.0
        %417 = vmatpush.msra.mxu0 0.0
        %418 = vmatpush.msra.mxu0 0.0
        %419 = vmatpush.msra.mxu0 0.0
        %420 = vmatpush.msra.mxu0 0.0
        %421 = vmatpush.msra.mxu0 0.0
        %422 = vmatpush.msra.mxu0 0.0
        %423 = vmatpush.msra.mxu0 0.0
        %424 = vmatpush.msra.mxu0 0.0
        %425 = vmatpush.msra.mxu0 0.0
        %426 = vmatpush.msra.mxu0 0.0
        %427 = vmatpush.msra.mxu0 %v403
        %428 = vmatpush.msra.mxu0 %v402
        %429 = vmatpush.msra.mxu0 %v401
        %430 = vmatpush.msra.mxu0 %v400
        %431 = vmatmul.f32.gmra.mxu0 %v410
        %v432 = vpop.f32.mrf.mxu0
        %v433 = vadd.f32 %v406, %v432
        %434 = vmatmul.f32.gmra.mxu0 %v413
        %v435 = vpop.f32.mrf.mxu0
        %v436 = vadd.f32 %v406, %v435
        %437 = vdwg.mxu0
        %v438 = vld [vmem:[%s387] sm:$0xff]
        %v439 = vld [vmem:[%s387 + $0x8] sm:$0xff]
        %v440 = vld [vmem:[%s393] sm:$0xff]
        %v441 = vld [vmem:[%s393 + $0x8] sm:$0xff]
        %443 = vrot.lane.b32.xlu0 %v433, 96
        %v444 = vpop.permute.xlu0 %443
        %v445 = vsel %vm408, %v433, 0
        %v447 = vsel %vm408, %v444, 0
        %449 = vmatpush.xpose.msra.mxu0 0.0
        %450 = vmatpush.xpose.msra.mxu0 0.0
        %451 = vmatpush.xpose.msra.mxu0 0.0
        %452 = vmatpush.xpose.msra.mxu0 0.0
        %453 = vmatpush.xpose.msra.mxu0 0.0
        %454 = vmatpush.xpose.msra.mxu0 0.0
        %455 = vmatpush.xpose.msra.mxu0 0.0
        %456 = vmatpush.xpose.msra.mxu0 0.0
        %457 = vmatpush.xpose.msra.mxu0 0.0
        %458 = vmatpush.xpose.msra.mxu0 0.0
        %459 = vmatpush.xpose.msra.mxu0 0.0
        %460 = vmatpush.xpose.msra.mxu0 0.0
        %461 = vmatpush.xpose.msra.mxu0 0.0
        %462 = vmatpush.xpose.msra.mxu0 0.0
        %463 = vmatpush.xpose.msra.mxu0 0.0
        %464 = vmatpush.xpose.msra.mxu0 %v447
        %465 = vmatmul.f32.gmra.mxu0 %v445
        %v466 = vpop.f32.mrf.mxu0
        %v467 = vadd.f32 0.0, %v466
        %468 = vdwg.mxu0
        %470 = vrot.lane.b32.xlu0 %v436, 96
        %v471 = vpop.permute.xlu0 %470
        %v472 = vsel %vm408, %v436, 0
        %v474 = vsel %vm408, %v471, 0
        %476 = vmatpush.xpose.msra.mxu0 0.0
        %477 = vmatpush.xpose.msra.mxu0 0.0
        %478 = vmatpush.xpose.msra.mxu0 0.0
        %479 = vmatpush.xpose.msra.mxu0 0.0
        %480 = vmatpush.xpose.msra.mxu0 0.0
        %481 = vmatpush.xpose.msra.mxu0 0.0
        %482 = vmatpush.xpose.msra.mxu0 0.0
        %483 = vmatpush.xpose.msra.mxu0 0.0
        %484 = vmatpush.xpose.msra.mxu0 0.0
        %485 = vmatpush.xpose.msra.mxu0 0.0
        %486 = vmatpush.xpose.msra.mxu0 0.0
        %487 = vmatpush.xpose.msra.mxu0 0.0
        %488 = vmatpush.xpose.msra.mxu0 0.0
        %489 = vmatpush.xpose.msra.mxu0 0.0
        %490 = vmatpush.xpose.msra.mxu0 0.0
        %491 = vmatpush.xpose.msra.mxu0 %v474
        %492 = vmatmul.f32.gmra.mxu0 %v472
        %v493 = vpop.f32.mrf.mxu0
        %v494 = vadd.f32 0.0, %v493
        %495 = vdwg.mxu0
        %vm496 = vcmask 64512
        %v497 = vsel %vm496, %v467, -inf
        %v498 = vrot.slane %v497, 4
        %v499 = vmax.f32 %v497, %v498
        %v500 = vrot.slane %v499, 2
        %v501 = vmax.f32 %v499, %v500
        %v502 = vrot.slane %v501, 1
        %v503 = vmax.f32 %v501, %v502
        %v504 = vsel %vm496, %v494, -inf
        %v505 = vrot.slane %v504, 4
        %v506 = vmax.f32 %v504, %v505
        %v507 = vrot.slane %v506, 2
        %v508 = vmax.f32 %v506, %v507
        %v509 = vrot.slane %v508, 1
        %v510 = vmax.f32 %v508, %v509
        %v511 = vsub.f32 %v467, %v503
        %v512 = vsub.f32 %v494, %v510
        %v513 = vmul.f32 %v511, 1.442695
        %v514 = vpow.pop %v513
        %v515 = vmul.f32 %v512, 1.442695
        %v516 = vpow.pop %v515
        %v517 = vsel %vm496, %v514, 0.0
        %v518 = vrot.slane %v517, 4
        %v519 = vadd.f32 %v517, %v518
        %v520 = vrot.slane %v519, 2
        %v521 = vadd.f32 %v519, %v520
        %v522 = vrot.slane %v521, 1
        %v523 = vadd.f32 %v521, %v522
        %v524 = vsel %vm496, %v516, 0.0
        %v525 = vrot.slane %v524, 4
        %v526 = vadd.f32 %v524, %v525
        %v527 = vrot.slane %v526, 2
        %v528 = vadd.f32 %v526, %v527
        %v529 = vrot.slane %v528, 1
        %v530 = vadd.f32 %v528, %v529
        %v531 = vrcp.pop %v523
        %v532 = vrcp.pop %v530
        %v533 = vmul.f32 %v514, %v531
        %v534 = vmul.f32 %v516, %v532
        %v536 = vsel %vm408, %v438, 0
        %538 = vmatpush.xpose.msra.mxu0 0.0
        %539 = vmatpush.xpose.msra.mxu0 0.0
        %540 = vmatpush.xpose.msra.mxu0 0.0
        %541 = vmatpush.xpose.msra.mxu0 0.0
        %542 = vmatpush.xpose.msra.mxu0 0.0
        %543 = vmatpush.xpose.msra.mxu0 0.0
        %544 = vmatpush.xpose.msra.mxu0 0.0
        %545 = vmatpush.xpose.msra.mxu0 0.0
        %546 = vmatpush.xpose.msra.mxu0 0.0
        %547 = vmatpush.xpose.msra.mxu0 0.0
        %548 = vmatpush.xpose.msra.mxu0 0.0
        %549 = vmatpush.xpose.msra.mxu0 0.0
        %550 = vmatpush.xpose.msra.mxu0 0.0
        %551 = vmatpush.xpose.msra.mxu0 0.0
        %552 = vmatpush.xpose.msra.mxu0 0.0
        %553 = vmatpush.xpose.msra.mxu0 %v536
        %554 = vmatmul.f32.gmra.mxu0 %v445
        %v555 = vpop.f32.mrf.mxu0
        %v556 = vadd.f32 0.0, %v555
        %557 = vdwg.mxu0
        %v559 = vsel %vm408, %v439, 0
        %561 = vmatpush.xpose.msra.mxu0 0.0
        %562 = vmatpush.xpose.msra.mxu0 0.0
        %563 = vmatpush.xpose.msra.mxu0 0.0
        %564 = vmatpush.xpose.msra.mxu0 0.0
        %565 = vmatpush.xpose.msra.mxu0 0.0
        %566 = vmatpush.xpose.msra.mxu0 0.0
        %567 = vmatpush.xpose.msra.mxu0 0.0
        %568 = vmatpush.xpose.msra.mxu0 0.0
        %569 = vmatpush.xpose.msra.mxu0 0.0
        %570 = vmatpush.xpose.msra.mxu0 0.0
        %571 = vmatpush.xpose.msra.mxu0 0.0
        %572 = vmatpush.xpose.msra.mxu0 0.0
        %573 = vmatpush.xpose.msra.mxu0 0.0
        %574 = vmatpush.xpose.msra.mxu0 0.0
        %575 = vmatpush.xpose.msra.mxu0 0.0
        %576 = vmatpush.xpose.msra.mxu0 %v559
        %577 = vmatmul.f32.gmra.mxu0 %v472
        %v578 = vpop.f32.mrf.mxu0
        %v579 = vadd.f32 0.0, %v578
        %580 = vdwg.mxu0
        %v581 = vsel %vm496, %v556, -inf
        %v582 = vrot.slane %v581, 4
        %v583 = vmax.f32 %v581, %v582
        %v584 = vrot.slane %v583, 2
        %v585 = vmax.f32 %v583, %v584
        %v586 = vrot.slane %v585, 1
        %v587 = vmax.f32 %v585, %v586
        %v588 = vsel %vm496, %v579, -inf
        %v589 = vrot.slane %v588, 4
        %v590 = vmax.f32 %v588, %v589
        %v591 = vrot.slane %v590, 2
        %v592 = vmax.f32 %v590, %v591
        %v593 = vrot.slane %v592, 1
        %v594 = vmax.f32 %v592, %v593
        %v595 = vsub.f32 %v556, %v587
        %v596 = vsub.f32 %v579, %v594
        %v597 = vmul.f32 %v595, 1.442695
        %v598 = vpow.pop %v597
        %v599 = vmul.f32 %v596, 1.442695
        %v600 = vpow.pop %v599
        %v601 = vsel %vm496, %v598, 0.0
        %v602 = vrot.slane %v601, 4
        %v603 = vadd.f32 %v601, %v602
        %v604 = vrot.slane %v603, 2
        %v605 = vadd.f32 %v603, %v604
        %v606 = vrot.slane %v605, 1
        %v607 = vadd.f32 %v605, %v606
        %v608 = vsel %vm496, %v600, 0.0
        %v609 = vrot.slane %v608, 4
        %v610 = vadd.f32 %v608, %v609
        %v611 = vrot.slane %v610, 2
        %v612 = vadd.f32 %v610, %v611
        %v613 = vrot.slane %v612, 1
        %v614 = vadd.f32 %v612, %v613
        %v615 = vrcp.pop %v607
        %v616 = vrcp.pop %v614
        %v617 = vmul.f32 %v598, %v615
        %v618 = vmul.f32 %v600, %v616
        %v620 = vsel %vm496, %v617, 0
        %622 = vmatpush.msra.mxu0 0.0
        %623 = vmatpush.msra.mxu0 0.0
        %624 = vmatpush.msra.mxu0 0.0
        %625 = vmatpush.msra.mxu0 0.0
        %626 = vmatpush.msra.mxu0 0.0
        %627 = vmatpush.msra.mxu0 0.0
        %628 = vmatpush.msra.mxu0 0.0
        %629 = vmatpush.msra.mxu0 0.0
        %630 = vmatpush.msra.mxu0 0.0
        %631 = vmatpush.msra.mxu0 0.0
        %632 = vmatpush.msra.mxu0 0.0
        %633 = vmatpush.msra.mxu0 0.0
        %634 = vmatpush.msra.mxu0 0.0
        %635 = vmatpush.msra.mxu0 0.0
        %636 = vmatpush.msra.mxu0 0.0
        %637 = vmatpush.msra.mxu0 %v440
        %638 = vmatmul.f32.gmra.mxu0 %v620
        %v639 = vpop.f32.mrf.mxu0
        %v640 = vadd.f32 0.0, %v639
        %641 = vdwg.mxu0
        %v643 = vsel %vm496, %v618, 0
        %645 = vmatpush.msra.mxu0 0.0
        %646 = vmatpush.msra.mxu0 0.0
        %647 = vmatpush.msra.mxu0 0.0
        %648 = vmatpush.msra.mxu0 0.0
        %649 = vmatpush.msra.mxu0 0.0
        %650 = vmatpush.msra.mxu0 0.0
        %651 = vmatpush.msra.mxu0 0.0
        %652 = vmatpush.msra.mxu0 0.0
        %653 = vmatpush.msra.mxu0 0.0
        %654 = vmatpush.msra.mxu0 0.0
        %655 = vmatpush.msra.mxu0 0.0
        %656 = vmatpush.msra.mxu0 0.0
        %657 = vmatpush.msra.mxu0 0.0
        %658 = vmatpush.msra.mxu0 0.0
        %659 = vmatpush.msra.mxu0 0.0
        %660 = vmatpush.msra.mxu0 %v441
        %661 = vmatmul.f32.gmra.mxu0 %v643
        %v662 = vpop.f32.mrf.mxu0
        %v663 = vadd.f32 0.0, %v662
        %664 = vdwg.mxu0
        %665 = vrot.lane.b32.xlu0 %v433, 64
        %v666 = vpop.permute.xlu0 %665
        %v669 = vsel %vm496, %v533, 0
        %671 = vmatpush.msra.mxu0 0.0
        %672 = vmatpush.msra.mxu0 0.0
        %673 = vmatpush.msra.mxu0 0.0
        %674 = vmatpush.msra.mxu0 0.0
        %675 = vmatpush.msra.mxu0 0.0
        %676 = vmatpush.msra.mxu0 0.0
        %677 = vmatpush.msra.mxu0 0.0
        %678 = vmatpush.msra.mxu0 0.0
        %679 = vmatpush.msra.mxu0 0.0
        %680 = vmatpush.msra.mxu0 0.0
        %681 = vmatpush.msra.mxu0 0.0
        %682 = vmatpush.msra.mxu0 0.0
        %683 = vmatpush.msra.mxu0 0.0
        %684 = vmatpush.msra.mxu0 0.0
        %685 = vmatpush.msra.mxu0 0.0
        %686 = vmatpush.msra.mxu0 %v666
        %687 = vmatmul.f32.gmra.mxu0 %v669
        %v688 = vpop.f32.mrf.mxu0
        %v689 = vadd.f32 %v640, %v688
        %690 = vdwg.mxu0
        %691 = vrot.lane.b32.xlu0 %v436, 64
        %v692 = vpop.permute.xlu0 %691
        %v695 = vsel %vm496, %v534, 0
        %697 = vmatpush.msra.mxu0 0.0
        %698 = vmatpush.msra.mxu0 0.0
        %699 = vmatpush.msra.mxu0 0.0
        %700 = vmatpush.msra.mxu0 0.0
        %701 = vmatpush.msra.mxu0 0.0
        %702 = vmatpush.msra.mxu0 0.0
        %703 = vmatpush.msra.mxu0 0.0
        %704 = vmatpush.msra.mxu0 0.0
        %705 = vmatpush.msra.mxu0 0.0
        %706 = vmatpush.msra.mxu0 0.0
        %707 = vmatpush.msra.mxu0 0.0
        %708 = vmatpush.msra.mxu0 0.0
        %709 = vmatpush.msra.mxu0 0.0
        %710 = vmatpush.msra.mxu0 0.0
        %711 = vmatpush.msra.mxu0 0.0
        %712 = vmatpush.msra.mxu0 %v692
        %713 = vmatmul.f32.gmra.mxu0 %v695
        %v714 = vpop.f32.mrf.mxu0
        %v715 = vadd.f32 %v663, %v714
        %716 = vdwg.mxu0
        %v717 = vld [vmem:[%s5] sm:$0xff]
        %v718 = vld [vmem:[%s5 + $0x8] sm:$0xff]
        %v719 = vld [vmem:[%s5 + $0x10] sm:$0xff]
        %v720 = vld [vmem:[%s5 + $0x18] sm:$0xff]
        %v721 = vld [vmem:[%s6] sm:$0x1]
        %v723 = vperm.slane %v721, 0
        %v726 = vsel %vm408, %v689, 0
        %v729 = vsel %vm408, %v715, 0
        %731 = vmatpush.msra.mxu0 0.0
        %732 = vmatpush.msra.mxu0 0.0
        %733 = vmatpush.msra.mxu0 0.0
        %734 = vmatpush.msra.mxu0 0.0
        %735 = vmatpush.msra.mxu0 0.0
        %736 = vmatpush.msra.mxu0 0.0
        %737 = vmatpush.msra.mxu0 0.0
        %738 = vmatpush.msra.mxu0 0.0
        %739 = vmatpush.msra.mxu0 0.0
        %740 = vmatpush.msra.mxu0 0.0
        %741 = vmatpush.msra.mxu0 0.0
        %742 = vmatpush.msra.mxu0 0.0
        %743 = vmatpush.msra.mxu0 %v720
        %744 = vmatpush.msra.mxu0 %v719
        %745 = vmatpush.msra.mxu0 %v718
        %746 = vmatpush.msra.mxu0 %v717
        %747 = vmatmul.f32.gmra.mxu0 %v726
        %v748 = vpop.f32.mrf.mxu0
        %v749 = vadd.f32 %v723, %v748
        %750 = vmatmul.f32.gmra.mxu0 %v729
        %v751 = vpop.f32.mrf.mxu0
        %v752 = vadd.f32 %v723, %v751
        %753 = vdwg.mxu0
        %754 = vst.msk [vmem:[%s362] sm:$0xff] %vm408, %v749
        %755 = vst.msk [vmem:[%s362 + $0x8] sm:$0xff] %vm408, %v752
        %756 = vst.msk [vmem:[%s369] sm:$0xff] %vm408, %v438
        %757 = vst.msk [vmem:[%s369 + $0x10] sm:$0xff] %vm408, %v439
        %758 = vst.msk [vmem:[%s376] sm:$0xff] %vm408, %v440
        %759 = vst.msk [vmem:[%s376 + $0x10] sm:$0xff] %vm408, %v441
        %762 = vst.msk [vmem:[%s369 + $0x8] sm:$0xff] %vm408, %v444
        %763 = vst.msk [vmem:[%s369 + $0x18] sm:$0xff] %vm408, %v471
        %764 = vst.msk [vmem:[%s376 + $0x8] sm:$0xff] %vm408, %v666
        %765 = vst.msk [vmem:[%s376 + $0x18] sm:$0xff] %vm408, %v692
        %s766 = sand.u32 %s197, 1
        %s767 = scalar_lea.sflag [#allocation3], %s766
        %s768 = sand.u32 %s197, 1
        %s769 = smul.addr %s768, 16
        %s770 = scalar_lea.vmem [#allocation2], %s769
        %s771 = sand.u32 %s27, 1
        %s772 = scalar_lea.sflag [#allocation5], %s771
        %s773 = sand.u32 %s223, 1
        %s774 = smul.addr %s773, 32
        %s775 = scalar_lea.vmem [#allocation4], %s774
        %s776 = sand.u32 %s27, 1
        %s777 = scalar_lea.sflag [#allocation5], %s776
        %s778 = sand.u32 %s249, 1
        %s779 = smul.addr %s778, 32
        %s780 = scalar_lea.vmem [#allocation6], %s779
        // Predicated region
        $region49: #{decoder_layer_forward.1} parent=47 // pred_check
          %p781 = pneg %p207
        $region50: #{decoder_layer_forward.1} parent=47 // pred_check_branch
          %783 = sbr.rel (%p781) target = $region52
        $region51: #{decoder_layer_forward.1} parent=47 // pred_region
          %s784 = smul.u32 2, %s27
          %786 = vsyncadd %s767, 0
          %s787 = smul.addr %s784, 8
          %s788 = scalar_lea.hbm %s7, %s787
          %s789 = sshll.u32 %s770, 4
          %s790 = int_to_ptr.vmem [resolvable:$true] %s789
          %s791 = sshll.u32 %s788, 4
          %s792 = int_to_ptr.hbm [resolvable:$true] %s791
          %797 = dma.vmem_to_hbm [thread:$0]  %s790, 256, %s792, %s767, 128, 128, 8
        $region52: #{decoder_layer_forward.1} parent=47 // pred_fallthru
          _
        // Predicated region
        $region53: #{decoder_layer_forward.1} parent=47 // pred_check
          %p798 = pneg %p233
        $region54: #{decoder_layer_forward.1} parent=47 // pred_check_branch
          %800 = sbr.rel (%p798) target = $region56
        $region55: #{decoder_layer_forward.1} parent=47 // pred_region
          %s801 = smul.u32 2, %s27
          %803 = vsyncadd %s772, 0
          %s804 = smul.addr %s801, 2
          %s805 = smul.addr %s804, 8
          %s806 = scalar_lea.hbm %s8, %s805
          %s807 = sshll.u32 %s775, 4
          %s808 = int_to_ptr.vmem [resolvable:$true] %s807
          %s809 = sshll.u32 %s806, 4
          %s810 = int_to_ptr.hbm [resolvable:$true] %s809
          %815 = dma.vmem_to_hbm [thread:$0]  %s808, 512, %s810, %s772, 128, 128, 8
        $region56: #{decoder_layer_forward.1} parent=47 // pred_fallthru
          _
        // Predicated region
        $region57: #{decoder_layer_forward.1} parent=47 // pred_check
          %p816 = pneg %p259
        $region58: #{decoder_layer_forward.1} parent=47 // pred_check_branch
          %818 = sbr.rel (%p816) target = $region60
        $region59: #{decoder_layer_forward.1} parent=47 // pred_region
          %s819 = smul.u32 2, %s27
          %821 = vsyncadd %s777, 0
          %s822 = smul.addr %s819, 2
          %s823 = smul.addr %s822, 8
          %s824 = scalar_lea.hbm %s9, %s823
          %s825 = sshll.u32 %s780, 4
          %s826 = int_to_ptr.vmem [resolvable:$true] %s825
          %s827 = sshll.u32 %s824, 4
          %s828 = int_to_ptr.hbm [resolvable:$true] %s827
          %833 = dma.vmem_to_hbm [thread:$0]  %s826, 512, %s828, %s777, 128, 128, 8
        $region60: #{decoder_layer_forward.1} parent=47 // pred_fallthru
          _
      $region48: #{decoder_layer_forward.1} parent=5 // pred_fallthru
        _
      %p834 = scmp.le.s32.totalorder 2, %s22
      // Predicated region
      $region61: #{decoder_layer_forward.1} parent=5 // pred_check
        %p835 = pneg %p834
      $region62: #{decoder_layer_forward.1} parent=5 // pred_check_branch
        %837 = sbr.rel (%p835) target = $region64
      $region63: #{decoder_layer_forward.1} parent=5 // pred_region
        %s838 = ssub.s32 %s22, 2
        // Predicated region
        $region65: #{decoder_layer_forward.1} parent=63 // pred_check
          %p839 = pneg %p213
        $region66: #{decoder_layer_forward.1} parent=63 // pred_check_branch
          %841 = sbr.rel (%p839) target = $region68
        $region67: #{decoder_layer_forward.1} parent=63 // pred_region
          %s842 = sand.u32 %s198, 1
          %s843 = scalar_lea.sflag [#allocation3], %s842
          %s844 = sand.u32 %s198, 1
          %s845 = smul.addr %s844, 16
          %s846 = scalar_lea.vmem [#allocation2], %s845
          %848 = dma.done %s843, 256
        $region68: #{decoder_layer_forward.1} parent=63 // pred_fallthru
          _
        // Predicated region
        $region69: #{decoder_layer_forward.1} parent=63 // pred_check
          %p849 = pneg %p239
        $region70: #{decoder_layer_forward.1} parent=63 // pred_check_branch
          %851 = sbr.rel (%p849) target = $region72
        $region71: #{decoder_layer_forward.1} parent=63 // pred_region
          %s852 = sand.u32 %s28, 1
          %s853 = scalar_lea.sflag [#allocation5], %s852
          %s854 = sand.u32 %s224, 1
          %s855 = smul.addr %s854, 32
          %s856 = scalar_lea.vmem [#allocation4], %s855
          %858 = dma.done %s853, 512
        $region72: #{decoder_layer_forward.1} parent=63 // pred_fallthru
          _
        // Predicated region
        $region73: #{decoder_layer_forward.1} parent=63 // pred_check
          %p859 = pneg %p265
        $region74: #{decoder_layer_forward.1} parent=63 // pred_check_branch
          %861 = sbr.rel (%p859) target = $region76
        $region75: #{decoder_layer_forward.1} parent=63 // pred_region
          %s862 = sand.u32 %s28, 1
          %s863 = scalar_lea.sflag [#allocation5], %s862
          %s864 = sand.u32 %s250, 1
          %s865 = smul.addr %s864, 32
          %s866 = scalar_lea.vmem [#allocation6], %s865
          %868 = dma.done %s863, 512
        $region76: #{decoder_layer_forward.1} parent=63 // pred_fallthru
          _
      $region64: #{decoder_layer_forward.1} parent=5 // pred_fallthru
        _
    $region6: #{decoder_layer_forward.1} parent=1 // loop_footer
      %s26 = sadd.s32 1, %s22
    $region7: #{decoder_layer_forward.1} parent=1 // loop_footer_branch
      %21 = sbr.rel target = $region3
    $region8: #{decoder_layer_forward.1} parent=1 // loop_exit
      _
    %869 = vsyncpa [#allocation3], 1
    %s870 = scalar_lea.sflag [#allocation3], 1
    %871 = vsyncpa %s870, 1
    %872 = vsyncpa [#allocation5], 1
    %s873 = scalar_lea.sflag [#allocation5], 1
    %874 = vsyncpa %s873, 1

</llo_original>
